<compile_context>
chip_gen: v6e
topology: v6e:2x2x1
jax: 0.10.0
libtpu: 0.0.40
codegen_flags: <defaults>
</compile_context>

<pallas_src>
import functools

import numpy as np
import jax
import jax.numpy as jnp
from jax.experimental import pallas as pl
from jax.experimental.pallas import tpu as pltpu


# -----------------------------------------------------------------------------
# Host-side glue: build circuit matrices (parameter setup, not the hot path)
# -----------------------------------------------------------------------------
def _rot_matrix(phi, theta, omega):
    """PennyLane qml.Rot(phi, theta, omega) = RZ(omega) RY(theta) RZ(phi)."""
    c, s = np.cos(theta / 2.0), np.sin(theta / 2.0)
    return np.array(
        [
            [np.exp(-0.5j * (phi + omega)) * c, -np.exp(0.5j * (phi - omega)) * s],
            [np.exp(0.5j * (phi - omega)) * s, np.exp(0.5j * (phi + omega)) * c],
        ],
        dtype=np.complex128,
    )


def build_layer_unitaries(weights, num_qubits):
    """Per-layer unitary L_i = (CNOT chain) @ (kron of Rot gates), wire 0 = MSB."""
    num_layers = weights.shape[0]
    dim = 2 ** num_qubits
    cnot = np.array(
        [[1, 0, 0, 0], [0, 1, 0, 0], [0, 0, 0, 1], [0, 0, 1, 0]], dtype=np.complex128
    )
    chain = np.eye(dim, dtype=np.complex128)
    for j in range(num_qubits - 1):
        full = np.kron(
            np.kron(np.eye(2 ** j, dtype=np.complex128), cnot),
            np.eye(2 ** (num_qubits - j - 2), dtype=np.complex128),
        )
        chain = full @ chain  # CNOTs applied in order j = 0, 1, ..., n-2
    layers = []
    for i in range(num_layers):
        rot_layer = np.array([[1.0]], dtype=np.complex128)
        for j in range(num_qubits):
            rot_layer = np.kron(rot_layer, _rot_matrix(*weights[i, j]))
        layers.append(chain @ rot_layer)
    return np.stack(layers)  # (L, D, D) complex128


def build_walsh_layer_mats(layers, num_qubits):
    """Fold BasisEmbedding's Hadamard factors into per-layer real block matrices.

    Row-vector update per layer l:  psi <- ((psi @ H) * chi_mask) @ A_l  with
    A_l = (1/D) H L_l^T.  Carrying t_l = (psi_{l-1} @ H) * chi gives
        t_{l+1} = (t_l @ (Blk(A_l) @ HB)) * chi ,   psi_final = t_{L-1} @ Blk(A_{L-1}).
    Returns the stacked C matrices, (L, 2D, 2D) float32.
    """
    num_layers = layers.shape[0]
    dim = 2 ** num_qubits
    s = np.arange(dim)
    anded = s[:, None] & s[None, :]
    pc = np.zeros_like(anded)
    for k in range(num_qubits):
        pc += (anded >> k) & 1
    H = np.where(pc % 2 == 0, 1.0, -1.0).astype(np.float64)  # (D, D), symmetric, +-1
    Z = np.zeros_like(H)
    HB = np.block([[H, Z], [Z, H]])                          # (2D, 2D)
    mats = []
    for l in range(num_layers):
        A = (H @ layers[l].T) / dim                          # complex (D, D)
        blk = np.block([[A.real, A.imag], [-A.imag, A.real]])
        if l < num_layers - 1:
            blk = blk @ HB                                   # pre-apply next layer's H
        mats.append(blk)
    return np.stack(mats).astype(np.float32)                 # (L, 2D, 2D)


def build_masks(x_bits, num_qubits):
    """Per-sample XOR mask for BasisEmbedding (X on wires whose bit is 1)."""
    batch, obs_len = x_bits.shape
    masks = np.zeros(batch, dtype=np.int32)
    for j in range(obs_len):
        masks |= (x_bits[:, j].astype(np.int32) & 1) << (num_qubits - 1 - j)
    return masks  # (B,) int32


def build_zsign(num_qubits, action_space):
    """zsignT[s, a] = <s| Z_a |s>, wire a at bit (n-1-a); stacked twice -> (2D, A)."""
    dim = 2 ** num_qubits
    s = np.arange(dim)
    cols = []
    for a in range(action_space):
        cols.append(1.0 - 2.0 * ((s >> (num_qubits - 1 - a)) & 1))
    z = np.stack(cols, axis=1).astype(np.float32)  # (D, A)
    return np.vstack([z, z])                        # (2D, A) for [Re|Im]^2 reduction


# -----------------------------------------------------------------------------
# Pallas kernel: batched Walsh-domain statevector evolution + PauliZ + scaling
# -----------------------------------------------------------------------------
def _vqc_kernel(mask_ref, c_ref, zsgn_ref, scale_ref, out_ref, *,
                num_layers, num_qubits):
    dim = 1 << num_qubits
    two_d = 2 * dim
    bt = mask_ref.shape[0]

    masks = mask_ref[...]                                            # (BT, 1) int32
    col = jax.lax.broadcasted_iota(jnp.int32, (bt, two_d), 1)        # lane index
    s = col & (dim - 1)                                              # basis index in each half

    # chi[b, s] = (-1)^popcount(s & mask_b)  (parity via xor-fold, pure VPU work)
    p = s & masks
    p = p ^ (p >> 16)
    p = p ^ (p >> 8)
    p = p ^ (p >> 4)
    p = p ^ (p >> 2)
    p = p ^ (p >> 1)
    chi2 = 1.0 - 2.0 * (p & 1).astype(jnp.float32)                   # (BT, 2D)

    # Layer 0 specialization: |0..0> -> embedding -> Walsh domain is just [chi | 0].
    t = jnp.where(col < dim, chi2, 0.0)                              # (BT, 2D)

    # Layers 0..L-2: one fused (BT,2D)x(2D,2D) matmul + per-row sign multiply each.
    for l in range(num_layers - 1):
        t = jnp.dot(t, c_ref[l], preferred_element_type=jnp.float32) * chi2

    # Last layer (no trailing Hadamard): final state [Re(psi) | Im(psi)].
    psi = jnp.dot(t, c_ref[num_layers - 1], preferred_element_type=jnp.float32)

    # <Z_a> = sum_s (Re^2 + Im^2)[s] * sign[s, a]  via one matmul with stacked signs.
    expz = jnp.dot(psi * psi, zsgn_ref[...], preferred_element_type=jnp.float32)
    out_ref[...] = (expz + 1.0) * 0.5 * scale_ref[...]               # (BT, A)


def _round_up(x, m):
    return ((x + m - 1) // m) * m


def vqc_forward(x_bits, weights, expected_val_scaling,
                observation_length, num_layers, action_space):
    """Forward pass matching VQC.forward: returns ((B, action_space) float32, layers)."""
    assert num_layers >= 1
    num_qubits = max(observation_length, action_space)
    dim = 2 ** num_qubits
    two_d = 2 * dim
    batch = x_bits.shape[0]

    # Host-side precompute (parameters / tiny tables only; no per-sample matrices).
    layers = build_layer_unitaries(np.asarray(weights, dtype=np.float64), num_qubits)
    c_stack = jnp.asarray(build_walsh_layer_mats(layers, num_qubits))        # (L,2D,2D)
    zsgn2 = jnp.asarray(build_zsign(num_qubits, action_space))               # (2D, A)
    scale = jnp.asarray(np.asarray(expected_val_scaling, dtype=np.float32)[None, :])

    masks_np = build_masks(np.asarray(x_bits), num_qubits)                   # (B,)

    # Batch tiling: samples live in the sublane/M dimension of the matmuls.
    b_pad8 = _round_up(batch, 8)
    b_tile = min(256, b_pad8)           # 256 fills a v6e/v7x MXU push; tiny batches use one tile
    b_pad = _round_up(batch, b_tile)
    masks_pad = np.zeros((b_pad, 1), dtype=np.int32)
    masks_pad[:batch, 0] = masks_np
    masks = jnp.asarray(masks_pad)

    kernel = functools.partial(_vqc_kernel, num_layers=num_layers,
                               num_qubits=num_qubits)
    out = pl.pallas_call(
        kernel,
        out_shape=jax.ShapeDtypeStruct((b_pad, action_space), jnp.float32),
        grid=(b_pad // b_tile,),
        in_specs=[
            pl.BlockSpec((b_tile, 1), lambda i: (i, 0)),                 # XOR masks
            pl.BlockSpec((num_layers, two_d, two_d), lambda i: (0, 0, 0)),  # layer mats
            pl.BlockSpec((two_d, action_space), lambda i: (0, 0)),       # PauliZ signs x2
            pl.BlockSpec((1, action_space), lambda i: (0, 0)),           # output scaling
        ],
        out_specs=pl.BlockSpec((b_tile, action_space), lambda i: (i, 0)),
        compiler_params=pltpu.CompilerParams(dimension_semantics=("parallel",)),
    )(masks, c_stack, zsgn2, scale)
    return out[:batch], layers


# -----------------------------------------------------------------------------
# NumPy complex128 reference of the same circuit semantics
# -----------------------------------------------------------------------------
def reference_forward(x_bits, layers, expected_val_scaling,
                      observation_length, action_space):
    num_qubits = max(observation_length, action_space)
    dim = 2 ** num_qubits
    outs = []
    for b in range(x_bits.shape[0]):
        mask = 0
        for j in range(observation_length):
            mask |= int(x_bits[b, j]) << (num_qubits - 1 - j)
        psi = np.zeros(dim, dtype=np.complex128)
        psi[0] = 1.0
        for L in layers:
            psi = psi[np.arange(dim) ^ mask]  # BasisEmbedding (X on set bits)
            psi = L @ psi
        probs = np.abs(psi) ** 2
        vals = []
        for a in range(action_space):
            sign = 1.0 - 2.0 * ((np.arange(dim) >> (num_qubits - 1 - a)) & 1)
            ev = float(np.sum(probs * sign))
            vals.append((ev + 1.0) / 2.0 * float(expected_val_scaling[a]))
        outs.append(vals)
    return np.array(outs, dtype=np.float32)


if __name__ == "__main__":
    observation_length = 4
    num_layers = 2
    action_space = 3
    batch = 2
    num_qubits = max(observation_length, action_space)

    key = jax.random.PRNGKey(0)
    k_w, k_x = jax.random.split(key)
    # Parameters (deterministic, matching shapes of the nn.Parameters).
    weights = jax.random.normal(k_w, (num_layers, num_qubits, 3), dtype=jnp.float32)
    expected_val_scaling = jnp.ones((action_space,), dtype=jnp.float32)
    # Binary BasisEmbedding inputs: (B, observation_length).
    x = jax.random.bernoulli(k_x, 0.5, (batch, observation_length)).astype(jnp.int32)

    out, layers = vqc_forward(x, weights, expected_val_scaling,
                              observation_length, num_layers, action_space)
    out = jax.block_until_ready(out)

    ref = reference_forward(np.asarray(x), layers, np.asarray(expected_val_scaling),
                            observation_length, action_space)
    np.testing.assert_allclose(np.asarray(out), ref, rtol=1e-4, atol=1e-4)
    print("KERNEL_OK")
</pallas_src>

<mosaic_0001>
module attributes {stable_mosaic.version = 11 : i64} {
  func.func @_vqc_kernel(%arg0: i32, %arg1: memref<8x1xi32, #tpu.memory_space<vmem>>, %arg2: memref<2x32x32xf32, #tpu.memory_space<vmem>>, %arg3: memref<32x3xf32, #tpu.memory_space<vmem>>, %arg4: memref<1x3xf32, #tpu.memory_space<vmem>>, %arg5: memref<8x3xf32, #tpu.memory_space<vmem>>) attributes {dimension_semantics = [#tpu.dimension_semantics<parallel>], iteration_bounds = array<i64: 1>, scalar_prefetch = 0 : i64, scratch_operands = 0 : i64, tpu.core_type = #tpu.core_type<tc>, window_params = [{transform_indices = @transform_0, window_bounds = array<i64: 8, 1>}, {pipeline_mode = #tpu.pipeline_mode<synchronous>, transform_indices = @transform_1, window_bounds = array<i64: 2, 32, 32>}, {pipeline_mode = #tpu.pipeline_mode<synchronous>, transform_indices = @transform_2, window_bounds = array<i64: 32, 3>}, {pipeline_mode = #tpu.pipeline_mode<synchronous>, transform_indices = @transform_3, window_bounds = array<i64: 1, 3>}, {transform_indices = @transform_4, window_bounds = array<i64: 8, 3>}]} {
    %c0 = arith.constant 0 : index
    %c0_0 = arith.constant 0 : index
    %0 = vector.load %arg1[%c0, %c0_0] : memref<8x1xi32, #tpu.memory_space<vmem>>, vector<8x1xi32>
    %1 = tpu.iota {dimensions = array<i32: 1>} : vector<8x32xi32>
    %c15_i32 = arith.constant 15 : i32
    %2 = vector.broadcast %c15_i32 : i32 to vector<8x32xi32>
    %3 = arith.andi %1, %2 : vector<8x32xi32>
    %4 = vector.broadcast %0 : vector<8x1xi32> to vector<8x32xi32>
    %5 = arith.andi %3, %4 : vector<8x32xi32>
    %c16_i32 = arith.constant 16 : i32
    %6 = vector.broadcast %c16_i32 : i32 to vector<8x32xi32>
    %7 = arith.shrsi %5, %6 : vector<8x32xi32>
    %8 = arith.xori %5, %7 : vector<8x32xi32>
    %c8_i32 = arith.constant 8 : i32
    %9 = vector.broadcast %c8_i32 : i32 to vector<8x32xi32>
    %10 = arith.shrsi %8, %9 : vector<8x32xi32>
    %11 = arith.xori %8, %10 : vector<8x32xi32>
    %c4_i32 = arith.constant 4 : i32
    %12 = vector.broadcast %c4_i32 : i32 to vector<8x32xi32>
    %13 = arith.shrsi %11, %12 : vector<8x32xi32>
    %14 = arith.xori %11, %13 : vector<8x32xi32>
    %c2_i32 = arith.constant 2 : i32
    %15 = vector.broadcast %c2_i32 : i32 to vector<8x32xi32>
    %16 = arith.shrsi %14, %15 : vector<8x32xi32>
    %17 = arith.xori %14, %16 : vector<8x32xi32>
    %c1_i32 = arith.constant 1 : i32
    %18 = vector.broadcast %c1_i32 : i32 to vector<8x32xi32>
    %19 = arith.shrsi %17, %18 : vector<8x32xi32>
    %20 = arith.xori %17, %19 : vector<8x32xi32>
    %c1_i32_1 = arith.constant 1 : i32
    %21 = vector.broadcast %c1_i32_1 : i32 to vector<8x32xi32>
    %22 = arith.andi %20, %21 : vector<8x32xi32>
    %23 = arith.sitofp %22 : vector<8x32xi32> to vector<8x32xf32>
    %cst = arith.constant 2.000000e+00 : f32
    %24 = vector.broadcast %cst : f32 to vector<8x32xf32>
    %25 = arith.mulf %24, %23 : vector<8x32xf32>
    %cst_2 = arith.constant 1.000000e+00 : f32
    %26 = vector.broadcast %cst_2 : f32 to vector<8x32xf32>
    %27 = arith.subf %26, %25 : vector<8x32xf32>
    %c16_i32_3 = arith.constant 16 : i32
    %28 = vector.broadcast %c16_i32_3 : i32 to vector<8x32xi32>
    %29 = arith.cmpi slt, %1, %28 : vector<8x32xi32>
    %cst_4 = arith.constant 0.000000e+00 : f32
    %30 = vector.broadcast %cst_4 : f32 to vector<8x32xf32>
    %31 = arith.select %29, %27, %30 : vector<8x32xi1>, vector<8x32xf32>
    %c0_5 = arith.constant 0 : index
    %c0_6 = arith.constant 0 : index
    %c0_7 = arith.constant 0 : index
    %32 = vector.load %arg2[%c0_5, %c0_6, %c0_7] : memref<2x32x32xf32, #tpu.memory_space<vmem>>, vector<1x32x32xf32>
    %33 = vector.shape_cast %32 : vector<1x32x32xf32> to vector<32x32xf32>
    %cst_8 = arith.constant dense<0.000000e+00> : vector<8x32xf32>
    %34 = tpu.matmul %31, %33, %cst_8 {dimension_numbers = #tpu.dot_dimension_numbers<[1], [0], [0], [1], [0, 0, 1, 1], [], []>} : vector<8x32xf32>, vector<32x32xf32>, vector<8x32xf32> -> vector<8x32xf32>
    %35 = arith.mulf %34, %27 : vector<8x32xf32>
    %c1 = arith.constant 1 : index
    %c0_9 = arith.constant 0 : index
    %c0_10 = arith.constant 0 : index
    %36 = vector.load %arg2[%c1, %c0_9, %c0_10] : memref<2x32x32xf32, #tpu.memory_space<vmem>>, vector<1x32x32xf32>
    %37 = vector.shape_cast %36 : vector<1x32x32xf32> to vector<32x32xf32>
    %cst_11 = arith.constant dense<0.000000e+00> : vector<8x32xf32>
    %38 = tpu.matmul %35, %37, %cst_11 {dimension_numbers = #tpu.dot_dimension_numbers<[1], [0], [0], [1], [0, 0, 1, 1], [], []>} : vector<8x32xf32>, vector<32x32xf32>, vector<8x32xf32> -> vector<8x32xf32>
    %39 = arith.mulf %38, %38 : vector<8x32xf32>
    %c0_12 = arith.constant 0 : index
    %c0_13 = arith.constant 0 : index
    %40 = vector.load %arg3[%c0_12, %c0_13] : memref<32x3xf32, #tpu.memory_space<vmem>>, vector<32x3xf32>
    %cst_14 = arith.constant dense<0.000000e+00> : vector<8x3xf32>
    %41 = tpu.matmul %39, %40, %cst_14 {dimension_numbers = #tpu.dot_dimension_numbers<[1], [0], [0], [1], [0, 0, 1, 1], [], []>} : vector<8x32xf32>, vector<32x3xf32>, vector<8x3xf32> -> vector<8x3xf32>
    %cst_15 = arith.constant 1.000000e+00 : f32
    %42 = vector.broadcast %cst_15 : f32 to vector<8x3xf32>
    %43 = arith.addf %41, %42 : vector<8x3xf32>
    %cst_16 = arith.constant 5.000000e-01 : f32
    %44 = vector.broadcast %cst_16 : f32 to vector<8x3xf32>
    %45 = arith.mulf %43, %44 : vector<8x3xf32>
    %c0_17 = arith.constant 0 : index
    %c0_18 = arith.constant 0 : index
    %46 = vector.load %arg4[%c0_17, %c0_18] : memref<1x3xf32, #tpu.memory_space<vmem>>, vector<1x3xf32>
    %47 = vector.broadcast %46 : vector<1x3xf32> to vector<8x3xf32>
    %48 = arith.mulf %45, %47 : vector<8x3xf32>
    %c0_19 = arith.constant 0 : index
    %c0_20 = arith.constant 0 : index
    %49 = vector.load %arg5[%c0_19, %c0_20] : memref<8x3xf32, #tpu.memory_space<vmem>>, vector<8x3xf32>
    tpu.vector_store %arg5[%c0_19, %c0_20], %48 {strides = array<i32>} : memref<8x3xf32, #tpu.memory_space<vmem>>, vector<8x3xf32>,
    return
  }
  func.func @transform_0(%arg0: i32) -> (i32, i32) {
    %c0_i32 = arith.constant 0 : i32
    %c0_i32_0 = arith.constant 0 : i32
    return %arg0, %c0_i32 : i32, i32
  }
  func.func @transform_1(%arg0: i32) -> (i32, i32, i32) {
    %c0_i32 = arith.constant 0 : i32
    %c0_i32_0 = arith.constant 0 : i32
    %c0_i32_1 = arith.constant 0 : i32
    %c0_i32_2 = arith.constant 0 : i32
    return %c0_i32, %c0_i32_0, %c0_i32_1 : i32, i32, i32
  }
  func.func @transform_2(%arg0: i32) -> (i32, i32) {
    %c0_i32 = arith.constant 0 : i32
    %c0_i32_0 = arith.constant 0 : i32
    %c0_i32_1 = arith.constant 0 : i32
    return %c0_i32, %c0_i32_0 : i32, i32
  }
  func.func @transform_3(%arg0: i32) -> (i32, i32) {
    %c0_i32 = arith.constant 0 : i32
    %c0_i32_0 = arith.constant 0 : i32
    %c0_i32_1 = arith.constant 0 : i32
    return %c0_i32, %c0_i32_0 : i32, i32
  }
  func.func @transform_4(%arg0: i32) -> (i32, i32) {
    %c0_i32 = arith.constant 0 : i32
    %c0_i32_0 = arith.constant 0 : i32
    return %arg0, %c0_i32 : i32, i32
  }
}

</mosaic_0001>

<llo_original>
// kernel: tpu_custom_call.1
$region0: #{tpu_custom_call.1}
  #allocation0 [shape = 'u32[]', space=smem, size = 0x4, offset = 0x4, fixed_abs, tag = 'smem constant byte address 0x4 - core index']
  #allocation1 [shape = 'u32[144,128]{1,0:T(1,128)}', space=vmem, size = 0x12000, scoped, tag = 'internal scratch']
  %s0 = inlined_call_operand.vmem [shape: s32[8,1], index: 0, kind: input, shape index: {}]
  %s1 = inlined_call_operand.hbm [shape: f32[2,32,32], index: 1, kind: input, shape index: {}]
  %s2 = inlined_call_operand.vmem [shape: f32[32,3], index: 2, kind: input, shape index: {}]
  %s3 = inlined_call_operand.vmem [shape: f32[1,3], index: 3, kind: input, shape index: {}]
  %s4 = inlined_call_operand.vmem [shape: f32[8,3], index: 4, kind: output, shape index: {}]
  %s5 = sld [smem:[#allocation0]]
  $region30: #{tpu_custom_call.1} parent=0
    _
  %s7 = ssub.s32 1, %s5
  %s8 = scalar_select 0, %s7, %s5
  $region1: #{tpu_custom_call.1} parent=0
    #allocation2 [shape = 'u8[32768]{0}', space=vmem, size = 0x8000, scoped, tag = 'input window, operand 1, single buffered']
    #allocation3 [shape = 's32[1]{0}', space=sflag, size = 0x4, scoped, tag = 'scoped memory for tpu_custom_call.1']
    %9 = vsyncpa [#allocation3], 0
    // Predicated region
    $region2: #{tpu_custom_call.1} parent=1 // pred_check
      _
    $region3: #{tpu_custom_call.1} parent=1 // pred_check_branch
      %11 = sbr.rel (0) target = $region5
    $region4: #{tpu_custom_call.1} parent=1 // pred_region
      _
    $region5: #{tpu_custom_call.1} parent=1 // pred_fallthru
      _
    // Predicated region
    $region6: #{tpu_custom_call.1} parent=1 // pred_check
      _
    $region7: #{tpu_custom_call.1} parent=1 // pred_check_branch
      %13 = sbr.rel (0) target = $region9
    $region8: #{tpu_custom_call.1} parent=1 // pred_region
      %s15 = ssub.s32 1024, 1024
      %16 = vsyncadd [#allocation3], %s15
      %s17 = sshll.u32 [#allocation2], 4
      %s18 = int_to_ptr.vmem [resolvable:$true] %s17
      %23 = dma.hbm_to_vmem [thread:$0]  %s1, 1024, %s18, [#allocation3], 128, 128, 8
    $region9: #{tpu_custom_call.1} parent=1 // pred_fallthru
      _
    // Predicated region
    $region10: #{tpu_custom_call.1} parent=1 // pred_check
      _
    $region11: #{tpu_custom_call.1} parent=1 // pred_check_branch
      %25 = sbr.rel (0) target = $region13
    $region12: #{tpu_custom_call.1} parent=1 // pred_region
      _
    $region13: #{tpu_custom_call.1} parent=1 // pred_fallthru
      _
    // Predicated region
    $region14: #{tpu_custom_call.1} parent=1 // pred_check
      _
    $region15: #{tpu_custom_call.1} parent=1 // pred_check_branch
      %27 = sbr.rel (0) target = $region17
    $region16: #{tpu_custom_call.1} parent=1 // pred_region
      _
    $region17: #{tpu_custom_call.1} parent=1 // pred_fallthru
      _
    // Predicated region
    $region18: #{tpu_custom_call.1} parent=1 // pred_check
      _
    $region19: #{tpu_custom_call.1} parent=1 // pred_check_branch
      %29 = sbr.rel (0) target = $region21
    $region20: #{tpu_custom_call.1} parent=1 // pred_region
      %30 = dma.done [#allocation3], 1024
    $region21: #{tpu_custom_call.1} parent=1 // pred_fallthru
      _
    %v31 = vld [vmem:[%s0] sm:$0xff]
    %v32 = vlaneseq
    %v33 = vand.u32 %v32, 127
    %v34 = vand.u32 %v33, 15
    %35 = vset.pattern.permute.xlu0 0
    %36 = vperm.xlu0 %35, %v31
    %v37 = vpop.permute.xlu0 %36
    %v38 = vand.u32 %v34, %v37
    %v39 = vshra.s32 %v38, 16
    %v40 = vxor.u32 %v38, %v39
    %v41 = vshra.s32 %v40, 8
    %v42 = vxor.u32 %v40, %v41
    %v43 = vshra.s32 %v42, 4
    %v44 = vxor.u32 %v42, %v43
    %v45 = vshra.s32 %v44, 2
    %v46 = vxor.u32 %v44, %v45
    %v47 = vshra.s32 %v46, 1
    %v48 = vxor.u32 %v46, %v47
    %v49 = vand.u32 %v48, 1
    %v50 = vcvt.s32.f32 %v49
    %v51 = vmul.f32 %v50, 2.0
    %v52 = vsub.f32 1.0, %v51
    %vm53 = vcmp.lt.s32.totalorder %v33, 16
    %v54 = vsel %vm53, %v52, 0.0
    %v55 = vld [vmem:[#allocation2] sm:$0xff]
    %v56 = vld [vmem:[#allocation2 + $0x8] sm:$0xff]
    %v57 = vld [vmem:[#allocation2 + $0x10] sm:$0xff]
    %v58 = vld [vmem:[#allocation2 + $0x18] sm:$0xff]
    %vm59 = vcmask 261120
    %v61 = vsel %vm59, %v54, 0
    %63 = vmatprep.subr.mxu0 0.0
    %64 = vmatpush1.msra.mxu0 0.0
    %65 = vmatprep.subr.mxu0 0.0
    %66 = vmatpush1.msra.mxu0 0.0
    %67 = vmatprep.subr.mxu0 0.0
    %68 = vmatpush1.msra.mxu0 0.0
    %69 = vmatprep.subr.mxu0 0.0
    %70 = vmatpush1.msra.mxu0 0.0
    %71 = vmatprep.subr.mxu0 0.0
    %72 = vmatpush1.msra.mxu0 0.0
    %73 = vmatprep.subr.mxu0 0.0
    %74 = vmatpush1.msra.mxu0 0.0
    %75 = vmatprep.subr.mxu0 0.0
    %76 = vmatpush1.msra.mxu0 0.0
    %77 = vmatprep.subr.mxu0 0.0
    %78 = vmatpush1.msra.mxu0 0.0
    %79 = vmatprep.subr.mxu0 0.0
    %80 = vmatpush1.msra.mxu0 0.0
    %81 = vmatprep.subr.mxu0 0.0
    %82 = vmatpush1.msra.mxu0 0.0
    %83 = vmatprep.subr.mxu0 0.0
    %84 = vmatpush1.msra.mxu0 0.0
    %85 = vmatprep.subr.mxu0 0.0
    %86 = vmatpush1.msra.mxu0 0.0
    %87 = vmatprep.subr.mxu0 0.0
    %88 = vmatpush1.msra.mxu0 %v58
    %89 = vmatprep.subr.mxu0 0.0
    %90 = vmatpush1.msra.mxu0 %v57
    %91 = vmatprep.subr.mxu0 0.0
    %92 = vmatpush1.msra.mxu0 %v56
    %93 = vmatprep.subr.mxu0 0.0
    %94 = vmatpush1.msra.mxu0 %v55
    %95 = vmatprep.subr.mxu0 0.0
    %96 = vmatpush2.msra.mxu0 0.0
    %97 = vmatprep.subr.mxu0 0.0
    %98 = vmatpush2.msra.mxu0 0.0
    %99 = vmatprep.subr.mxu0 0.0
    %100 = vmatpush2.msra.mxu0 0.0
    %101 = vmatprep.subr.mxu0 0.0
    %102 = vmatpush2.msra.mxu0 0.0
    %103 = vmatprep.subr.mxu0 0.0
    %104 = vmatpush2.msra.mxu0 0.0
    %105 = vmatprep.subr.mxu0 0.0
    %106 = vmatpush2.msra.mxu0 0.0
    %107 = vmatprep.subr.mxu0 0.0
    %108 = vmatpush2.msra.mxu0 0.0
    %109 = vmatprep.subr.mxu0 0.0
    %110 = vmatpush2.msra.mxu0 0.0
    %111 = vmatprep.subr.mxu0 0.0
    %112 = vmatpush2.msra.mxu0 0.0
    %113 = vmatprep.subr.mxu0 0.0
    %114 = vmatpush2.msra.mxu0 0.0
    %115 = vmatprep.subr.mxu0 0.0
    %116 = vmatpush2.msra.mxu0 0.0
    %117 = vmatprep.subr.mxu0 0.0
    %118 = vmatpush2.msra.mxu0 0.0
    %119 = vmatprep.subr.mxu0 0.0
    %120 = vmatpush2.msra.mxu0 0.0
    %121 = vmatprep.subr.mxu0 0.0
    %122 = vmatpush2.msra.mxu0 0.0
    %123 = vmatprep.subr.mxu0 0.0
    %124 = vmatpush2.msra.mxu0 0.0
    %125 = vmatprep.subr.mxu0 0.0
    %126 = vmatpush2.msra.mxu0 0.0
    %127 = vmatprep.mubr.f32.mxu0 0.0
    %128 = vmatmul.mubr.f32.gmra.mxu0 %v61
    %v129 = vpop.f32.mrf.mxu0
    %v130 = vadd.f32 0.0, %v129
    %v131 = vpop.f32.mrf.mxu0
    %132 = vdwg.mxu0
    %v133 = vmul.f32 %v130, %v52
    %s134 = scalar_lea.vmem [#allocation2], 32
    %v135 = vld [vmem:[%s134] sm:$0xff]
    %v136 = vld [vmem:[%s134 + $0x8] sm:$0xff]
    %v137 = vld [vmem:[%s134 + $0x10] sm:$0xff]
    %v138 = vld [vmem:[%s134 + $0x18] sm:$0xff]
    %v140 = vsel %vm59, %v133, 0
    %142 = vmatprep.subr.mxu0 0.0
    %143 = vmatpush1.msra.mxu0 0.0
    %144 = vmatprep.subr.mxu0 0.0
    %145 = vmatpush1.msra.mxu0 0.0
    %146 = vmatprep.subr.mxu0 0.0
    %147 = vmatpush1.msra.mxu0 0.0
    %148 = vmatprep.subr.mxu0 0.0
    %149 = vmatpush1.msra.mxu0 0.0
    %150 = vmatprep.subr.mxu0 0.0
    %151 = vmatpush1.msra.mxu0 0.0
    %152 = vmatprep.subr.mxu0 0.0
    %153 = vmatpush1.msra.mxu0 0.0
    %154 = vmatprep.subr.mxu0 0.0
    %155 = vmatpush1.msra.mxu0 0.0
    %156 = vmatprep.subr.mxu0 0.0
    %157 = vmatpush1.msra.mxu0 0.0
    %158 = vmatprep.subr.mxu0 0.0
    %159 = vmatpush1.msra.mxu0 0.0
    %160 = vmatprep.subr.mxu0 0.0
    %161 = vmatpush1.msra.mxu0 0.0
    %162 = vmatprep.subr.mxu0 0.0
    %163 = vmatpush1.msra.mxu0 0.0
    %164 = vmatprep.subr.mxu0 0.0
    %165 = vmatpush1.msra.mxu0 0.0
    %166 = vmatprep.subr.mxu0 0.0
    %167 = vmatpush1.msra.mxu0 %v138
    %168 = vmatprep.subr.mxu0 0.0
    %169 = vmatpush1.msra.mxu0 %v137
    %170 = vmatprep.subr.mxu0 0.0
    %171 = vmatpush1.msra.mxu0 %v136
    %172 = vmatprep.subr.mxu0 0.0
    %173 = vmatpush1.msra.mxu0 %v135
    %174 = vmatprep.subr.mxu0 0.0
    %175 = vmatpush2.msra.mxu0 0.0
    %176 = vmatprep.subr.mxu0 0.0
    %177 = vmatpush2.msra.mxu0 0.0
    %178 = vmatprep.subr.mxu0 0.0
    %179 = vmatpush2.msra.mxu0 0.0
    %180 = vmatprep.subr.mxu0 0.0
    %181 = vmatpush2.msra.mxu0 0.0
    %182 = vmatprep.subr.mxu0 0.0
    %183 = vmatpush2.msra.mxu0 0.0
    %184 = vmatprep.subr.mxu0 0.0
    %185 = vmatpush2.msra.mxu0 0.0
    %186 = vmatprep.subr.mxu0 0.0
    %187 = vmatpush2.msra.mxu0 0.0
    %188 = vmatprep.subr.mxu0 0.0
    %189 = vmatpush2.msra.mxu0 0.0
    %190 = vmatprep.subr.mxu0 0.0
    %191 = vmatpush2.msra.mxu0 0.0
    %192 = vmatprep.subr.mxu0 0.0
    %193 = vmatpush2.msra.mxu0 0.0
    %194 = vmatprep.subr.mxu0 0.0
    %195 = vmatpush2.msra.mxu0 0.0
    %196 = vmatprep.subr.mxu0 0.0
    %197 = vmatpush2.msra.mxu0 0.0
    %198 = vmatprep.subr.mxu0 0.0
    %199 = vmatpush2.msra.mxu0 0.0
    %200 = vmatprep.subr.mxu0 0.0
    %201 = vmatpush2.msra.mxu0 0.0
    %202 = vmatprep.subr.mxu0 0.0
    %203 = vmatpush2.msra.mxu0 0.0
    %204 = vmatprep.subr.mxu0 0.0
    %205 = vmatpush2.msra.mxu0 0.0
    %206 = vmatprep.mubr.f32.mxu0 0.0
    %207 = vmatmul.mubr.f32.gmra.mxu0 %v140
    %v208 = vpop.f32.mrf.mxu0
    %v209 = vadd.f32 0.0, %v208
    %v210 = vpop.f32.mrf.mxu0
    %211 = vdwg.mxu0
    %v212 = vmul.f32 %v209, %v209
    %v213 = vld [vmem:[%s2] sm:$0xff]
    %v214 = vld [vmem:[%s2 + $0x8] sm:$0xff]
    %v215 = vld [vmem:[%s2 + $0x10] sm:$0xff]
    %v216 = vld [vmem:[%s2 + $0x18] sm:$0xff]
    %v218 = vsel %vm59, %v212, 0
    %220 = vmatprep.subr.mxu0 0.0
    %221 = vmatpush1.msra.mxu0 0.0
    %222 = vmatprep.subr.mxu0 0.0
    %223 = vmatpush1.msra.mxu0 0.0
    %224 = vmatprep.subr.mxu0 0.0
    %225 = vmatpush1.msra.mxu0 0.0
    %226 = vmatprep.subr.mxu0 0.0
    %227 = vmatpush1.msra.mxu0 0.0
    %228 = vmatprep.subr.mxu0 0.0
    %229 = vmatpush1.msra.mxu0 0.0
    %230 = vmatprep.subr.mxu0 0.0
    %231 = vmatpush1.msra.mxu0 0.0
    %232 = vmatprep.subr.mxu0 0.0
    %233 = vmatpush1.msra.mxu0 0.0
    %234 = vmatprep.subr.mxu0 0.0
    %235 = vmatpush1.msra.mxu0 0.0
    %236 = vmatprep.subr.mxu0 0.0
    %237 = vmatpush1.msra.mxu0 0.0
    %238 = vmatprep.subr.mxu0 0.0
    %239 = vmatpush1.msra.mxu0 0.0
    %240 = vmatprep.subr.mxu0 0.0
    %241 = vmatpush1.msra.mxu0 0.0
    %242 = vmatprep.subr.mxu0 0.0
    %243 = vmatpush1.msra.mxu0 0.0
    %244 = vmatprep.subr.mxu0 0.0
    %245 = vmatpush1.msra.mxu0 %v216
    %246 = vmatprep.subr.mxu0 0.0
    %247 = vmatpush1.msra.mxu0 %v215
    %248 = vmatprep.subr.mxu0 0.0
    %249 = vmatpush1.msra.mxu0 %v214
    %250 = vmatprep.subr.mxu0 0.0
    %251 = vmatpush1.msra.mxu0 %v213
    %252 = vmatprep.subr.mxu0 0.0
    %253 = vmatpush2.msra.mxu0 0.0
    %254 = vmatprep.subr.mxu0 0.0
    %255 = vmatpush2.msra.mxu0 0.0
    %256 = vmatprep.subr.mxu0 0.0
    %257 = vmatpush2.msra.mxu0 0.0
    %258 = vmatprep.subr.mxu0 0.0
    %259 = vmatpush2.msra.mxu0 0.0
    %260 = vmatprep.subr.mxu0 0.0
    %261 = vmatpush2.msra.mxu0 0.0
    %262 = vmatprep.subr.mxu0 0.0
    %263 = vmatpush2.msra.mxu0 0.0
    %264 = vmatprep.subr.mxu0 0.0
    %265 = vmatpush2.msra.mxu0 0.0
    %266 = vmatprep.subr.mxu0 0.0
    %267 = vmatpush2.msra.mxu0 0.0
    %268 = vmatprep.subr.mxu0 0.0
    %269 = vmatpush2.msra.mxu0 0.0
    %270 = vmatprep.subr.mxu0 0.0
    %271 = vmatpush2.msra.mxu0 0.0
    %272 = vmatprep.subr.mxu0 0.0
    %273 = vmatpush2.msra.mxu0 0.0
    %274 = vmatprep.subr.mxu0 0.0
    %275 = vmatpush2.msra.mxu0 0.0
    %276 = vmatprep.subr.mxu0 0.0
    %277 = vmatpush2.msra.mxu0 0.0
    %278 = vmatprep.subr.mxu0 0.0
    %279 = vmatpush2.msra.mxu0 0.0
    %280 = vmatprep.subr.mxu0 0.0
    %281 = vmatpush2.msra.mxu0 0.0
    %282 = vmatprep.subr.mxu0 0.0
    %283 = vmatpush2.msra.mxu0 0.0
    %284 = vmatprep.mubr.f32.mxu0 0.0
    %285 = vmatmul.mubr.f32.gmra.mxu0 %v218
    %v286 = vpop.f32.mrf.mxu0
    %v287 = vadd.f32 1.0, %v286
    %v288 = vpop.f32.mrf.mxu0
    %289 = vdwg.mxu0
    %v290 = vmul.f32 %v287, 0.5
    %v291 = vld [vmem:[%s3] sm:$0x1]
    %v293 = vlaneseq
    %v294 = vshrl.u32 %v293, 7
    %v295 = vsub.s32 0, %v294
    %v296 = vrot.slane %v291, %v295
    %v298 = vmul.f32 %v290, %v296
    %vm299 = vcmask 23552
    %300 = vst.msk [vmem:[%s4] sm:$0xff] %vm299, %v298
    // Predicated region
    $region22: #{tpu_custom_call.1} parent=1 // pred_check
      _
    $region23: #{tpu_custom_call.1} parent=1 // pred_check_branch
      %302 = sbr.rel (0) target = $region25
    $region24: #{tpu_custom_call.1} parent=1 // pred_region
      _
    $region25: #{tpu_custom_call.1} parent=1 // pred_fallthru
      _
    // Predicated region
    $region26: #{tpu_custom_call.1} parent=1 // pred_check
      _
    $region27: #{tpu_custom_call.1} parent=1 // pred_check_branch
      %304 = sbr.rel (0) target = $region29
    $region28: #{tpu_custom_call.1} parent=1 // pred_region
      _
    $region29: #{tpu_custom_call.1} parent=1 // pred_fallthru
      _
    %305 = vsyncpa [#allocation3], 1

</llo_original>
